<compile_context>
chip_gen: v7x
topology: tpu7x:2x2x1
jax: 0.10.0
libtpu: 0.0.40
codegen_flags: <defaults>
</compile_context>

<pallas_src>
import jax
import jax.numpy as jnp
from jax.experimental import pallas as pl
from jax.experimental.pallas import tpu as pltpu


def _round_up(n, m):
    return ((n + m - 1) // m) * m


def _lane(n):
    return max(_round_up(n, 128), 128)


def _sublane(n):
    return max(_round_up(n, 8), 8)


def _vmem_capacity_bytes():
    """Physical VMEM of the attached TPU; falls back to the smallest (v7x)."""
    try:
        cap = getattr(pltpu.get_tpu_info(), "vmem_capacity_bytes", None)
        if cap:
            return int(cap)
    except Exception:
        pass
    return 64 << 20


def discriminator_kernel(x_ref, w1_ref, b1_ref, w2_ref, b2_ref,
                         gw_ref, c0_ref, o_ref):
    x = x_ref[...]                                        # (TB, F) f32

    # disc: Linear(F->H) -> ReLU -> Linear(H->F); MXU matmuls in bf16, f32 acc.
    h = jnp.dot(x.astype(jnp.bfloat16), w1_ref[...],
                preferred_element_type=jnp.float32) + b1_ref[...]
    h = jnp.maximum(h, 0.0)                               # ReLU
    y = jnp.dot(h.astype(jnp.bfloat16), w2_ref[...],
                preferred_element_type=jnp.float32)
    y = y + b2_ref[...] + x                               # bias + residual (f32)

    # LayerNorm statistics (biased variance, eps=1e-5) in f32.  The affine
    # (gamma, beta) and the classifier Linear(F->1) are fused algebraically:
    #   o = sum((ctr*rsqrt(var+eps)*gamma + beta) * wc) + bc
    #     = rsqrt(var+eps) * sum(ctr * (gamma*wc)) + (sum(beta*wc) + bc)
    #     = rsqrt(var+eps) * sum(ctr * gw)          + c0
    mean = jnp.mean(y, axis=-1, keepdims=True)
    ctr = y - mean
    var = jnp.mean(ctr * ctr, axis=-1, keepdims=True)
    dot = jnp.sum(ctr * gw_ref[...], axis=-1, keepdims=True)   # VPU mul + XLU reduce
    o_ref[...] = dot * jax.lax.rsqrt(var + 1e-5) + c0_ref[0]


def prepare_params(params):
    """One-time prep: bf16 matmul weights + fused-head coefficients.

    Hoisted out of the forward path so repeated calls do not re-read the f32
    weights from HBM / re-emit convert ops.
    """
    w1, b1, w2, b2, gamma, beta, wc, bc = params
    gw = (gamma * wc).astype(jnp.float32)                               # (1, F)
    c0 = (jnp.sum(beta * wc) + jnp.reshape(bc, ())).reshape(1)          # (1,)
    return (w1.astype(jnp.bfloat16), b1, w2.astype(jnp.bfloat16), b2,
            gw, c0.astype(jnp.float32))


def discriminator_forward(x, prepared, *, batch_tile=None):
    """x: (B, in_features) float32. prepared: prepare_params(...). -> (B, 1)."""
    B, F = x.shape
    w1_bf, b1, w2_bf, b2, gw, c0 = prepared
    H = w1_bf.shape[1]

    # Batch tile heuristic:
    #  * small batches -> one sublane-aligned tile (per-grid-step overhead
    #    dominates; splitting only adds steps).
    #  * large batches -> tiles up to 1024 rows but always >= 2 grid steps so
    #    the "parallel" batch axis shards across both v7x TensorCores.
    if batch_tile is None:
        if B <= 256:
            TB = _round_up(B, 8)
        else:
            TB = min(1024, _round_up(pl.cdiv(B, 2), 128))
    else:
        TB = _round_up(int(batch_tile), 8)       # enforce (8,128) sublane rule
    B_pad = _round_up(B, TB)
    x_p = x if B_pad == B else jnp.pad(x, ((0, B_pad - B), (0, 0)))

    # VMEM accounting.  Pallas double-buffers every input BlockSpec, including
    # the constant-index weight blocks, so count 2 buffers everywhere.
    resident = 2 * (_sublane(F) * _lane(H) + _sublane(H) * _lane(F)) * 2   # w1+w2 bf16
    resident += 2 * (_lane(H) + 2 * _lane(F)) * 8 * 4                      # b1,b2,gw rows
    per_step = TB * _lane(F) * 4 + TB * 128 * 4                            # x tile + out tile
    headroom = 2 << 20
    need = resident + 2 * per_step + headroom

    # Generation-aware clamp: never request the full physical VMEM (leave room
    # for compiler scratch/spill) -- ~54 MiB on v7x, ~109 MiB on v5e/v6e.
    cap = int(_vmem_capacity_bytes() * 0.85)
    if need > cap:
        # TODO(synk): add a hidden-dim (K)-tiled accumulator path for weights
        # too large to stay VMEM-resident on v7x; unnecessary at GAN-sized F/H.
        raise ValueError(
            f"Discriminator tiles need ~{need >> 20} MiB VMEM but only "
            f"~{cap >> 20} MiB is available; reduce batch_tile or add K-tiling.")
    vmem_limit = max(need, 4 << 20)

    grid = (B_pad // TB,)
    const2d = lambda shape: pl.BlockSpec(shape, lambda i: (0, 0))

    out = pl.pallas_call(
        discriminator_kernel,
        out_shape=jax.ShapeDtypeStruct((B_pad, 1), jnp.float32),
        grid=grid,
        in_specs=[
            pl.BlockSpec((TB, F), lambda i: (i, 0)),   # x: tiled over batch
            const2d((F, H)),                           # w1 (bf16, VMEM-resident)
            const2d((1, H)),                           # b1
            const2d((H, F)),                           # w2 (bf16, VMEM-resident)
            const2d((1, F)),                           # b2
            const2d((1, F)),                           # gw = gamma * wc (fused head)
            pl.BlockSpec(memory_space=pltpu.SMEM),     # c0 = sum(beta*wc) + bc
        ],
        out_specs=pl.BlockSpec((TB, 1), lambda i: (i, 0)),
        compiler_params=pltpu.CompilerParams(
            dimension_semantics=("parallel",),
            vmem_limit_bytes=int(vmem_limit)),
    )(x_p, w1_bf, b1, w2_bf, b2, gw, c0)

    return out[:B]


def init_params(key, in_features, hidden_dim):
    """Deterministic init mirroring nn.Linear / nn.LayerNorm shapes.

    PyTorch Linear weight is (out, in); w1/w2 are stored transposed (in, out)
    so the kernel computes x @ W + b directly.  The classifier weight is kept
    as a (1, in_features) row for the VPU head.
    """
    k1, k2, k3 = jax.random.split(key, 3)
    s1 = 1.0 / jnp.sqrt(in_features)
    s2 = 1.0 / jnp.sqrt(hidden_dim)

    w1 = jax.random.uniform(k1, (in_features, hidden_dim), jnp.float32, -s1, s1)
    b1 = jnp.zeros((1, hidden_dim), jnp.float32)
    w2 = jax.random.uniform(k2, (hidden_dim, in_features), jnp.float32, -s2, s2)
    b2 = jnp.zeros((1, in_features), jnp.float32)
    gamma = jnp.ones((1, in_features), jnp.float32)
    beta = jnp.zeros((1, in_features), jnp.float32)
    wc = jax.random.uniform(k3, (1, in_features), jnp.float32, -s1, s1)
    bc = jnp.zeros((1, 1), jnp.float32)
    return (w1, b1, w2, b2, gamma, beta, wc, bc)


def reference_forward_f32(x, params):
    """Plain-JAX f32 reference of the PyTorch forward."""
    w1, b1, w2, b2, gamma, beta, wc, bc = params
    h = jnp.maximum(x @ w1 + b1, 0.0)
    y = h @ w2 + b2 + x
    mean = jnp.mean(y, axis=-1, keepdims=True)
    var = jnp.mean((y - mean) ** 2, axis=-1, keepdims=True)
    yn = (y - mean) * jax.lax.rsqrt(var + 1e-5)
    yn = yn * gamma + beta
    return yn @ wc.T + bc


def reference_forward_bf16(x, params):
    """Same math with the kernel's bf16 matmul rounding (tight-tolerance ref)."""
    w1, b1, w2, b2, gamma, beta, wc, bc = params
    h = jnp.dot(x.astype(jnp.bfloat16), w1.astype(jnp.bfloat16),
                preferred_element_type=jnp.float32) + b1
    h = jnp.maximum(h, 0.0)
    y = jnp.dot(h.astype(jnp.bfloat16), w2.astype(jnp.bfloat16),
                preferred_element_type=jnp.float32) + b2 + x
    mean = jnp.mean(y, axis=-1, keepdims=True)
    var = jnp.mean((y - mean) ** 2, axis=-1, keepdims=True)
    yn = (y - mean) * jax.lax.rsqrt(var + 1e-5)
    yn = yn * gamma + beta
    return jnp.sum(yn * wc, axis=-1, keepdims=True) + bc


if __name__ == "__main__":
    key = jax.random.PRNGKey(0)
    k_x, k_p, k_x2, k_g, k_b = jax.random.split(key, 5)

    batch = 8
    in_features = 32
    hidden_dim = 64

    x = jax.random.normal(k_x, (batch, in_features), jnp.float32)
    params = init_params(k_p, in_features, hidden_dim)
    prepared = prepare_params(params)          # one-time bf16 + fused-head prep

    out = jax.block_until_ready(discriminator_forward(x, prepared))
    assert out.shape == (batch, 1)
    # Tight check vs a bf16-matmul-matched reference; loose check vs pure f32.
    assert jnp.allclose(out, reference_forward_bf16(x, params),
                        atol=1e-3, rtol=1e-3)
    assert jnp.allclose(out, reference_forward_f32(x, params),
                        atol=1e-1, rtol=1e-1)

    # Default multi-tile path: B=300 -> TB=256, 2 grid steps (v7x megacore),
    # 212 padded rows sliced off.
    batch2 = 300
    x2 = jax.random.normal(k_x2, (batch2, in_features), jnp.float32)
    out2 = jax.block_until_ready(discriminator_forward(x2, prepared))
    assert out2.shape == (batch2, 1)
    assert jnp.allclose(out2, reference_forward_bf16(x2, params),
                        atol=1e-3, rtol=1e-3)

    # Non-default LayerNorm affine (exercises the fused gw/c0 head) plus a
    # user batch_tile that is not a multiple of 8 (guard rounds 100 -> 104).
    w1, b1, w2, b2, _, _, wc, bc = params
    gamma2 = 1.0 + 0.1 * jax.random.normal(k_g, (1, in_features), jnp.float32)
    beta2 = 0.1 * jax.random.normal(k_b, (1, in_features), jnp.float32)
    params2 = (w1, b1, w2, b2, gamma2, beta2, wc, bc)
    prepared2 = prepare_params(params2)
    out3 = jax.block_until_ready(
        discriminator_forward(x2, prepared2, batch_tile=100))
    assert out3.shape == (batch2, 1)
    assert jnp.allclose(out3, reference_forward_bf16(x2, params2),
                        atol=1e-3, rtol=1e-3)

    print("KERNEL_OK")
</pallas_src>

<mosaic_0001>
module attributes {stable_mosaic.version = 11 : i64} {
  func.func @discriminator_kernel(%arg0: i32, %arg1: memref<8x32xf32, #tpu.memory_space<vmem>>, %arg2: memref<32x64xbf16, #tpu.memory_space<vmem>>, %arg3: memref<1x64xf32, #tpu.memory_space<vmem>>, %arg4: memref<64x32xbf16, #tpu.memory_space<vmem>>, %arg5: memref<1x32xf32, #tpu.memory_space<vmem>>, %arg6: memref<1x32xf32, #tpu.memory_space<vmem>>, %arg7: memref<1xf32, #tpu.memory_space<smem>>, %arg8: memref<8x1xf32, #tpu.memory_space<vmem>>) attributes {dimension_semantics = [#tpu.dimension_semantics<parallel>], iteration_bounds = array<i64: 1>, scalar_prefetch = 0 : i64, scratch_operands = 0 : i64, tpu.core_type = #tpu.core_type<tc>, window_params = [{transform_indices = @transform_0, window_bounds = array<i64: 8, 32>}, {pipeline_mode = #tpu.pipeline_mode<synchronous>, transform_indices = @transform_1, window_bounds = array<i64: 32, 64>}, {pipeline_mode = #tpu.pipeline_mode<synchronous>, transform_indices = @transform_2, window_bounds = array<i64: 1, 64>}, {pipeline_mode = #tpu.pipeline_mode<synchronous>, transform_indices = @transform_3, window_bounds = array<i64: 64, 32>}, {pipeline_mode = #tpu.pipeline_mode<synchronous>, transform_indices = @transform_4, window_bounds = array<i64: 1, 32>}, {pipeline_mode = #tpu.pipeline_mode<synchronous>, transform_indices = @transform_5, window_bounds = array<i64: 1, 32>}, {transform_indices = @transform_6, window_bounds = array<i64: 1>}, {transform_indices = @transform_7, window_bounds = array<i64: 8, 1>}]} {
    %c0 = arith.constant 0 : index
    %c0_0 = arith.constant 0 : index
    %0 = vector.load %arg1[%c0, %c0_0] : memref<8x32xf32, #tpu.memory_space<vmem>>, vector<8x32xf32>
    %1 = arith.truncf %0 : vector<8x32xf32> to vector<8x32xbf16>
    %c0_1 = arith.constant 0 : index
    %c0_2 = arith.constant 0 : index
    %2 = vector.load %arg2[%c0_1, %c0_2] : memref<32x64xbf16, #tpu.memory_space<vmem>>, vector<32x64xbf16>
    %cst = arith.constant dense<0.000000e+00> : vector<8x64xf32>
    %3 = tpu.matmul %1, %2, %cst {dimension_numbers = #tpu.dot_dimension_numbers<[1], [0], [0], [1], [0, 0, 1, 1], [], []>} : vector<8x32xbf16>, vector<32x64xbf16>, vector<8x64xf32> -> vector<8x64xf32>
    %c0_3 = arith.constant 0 : index
    %c0_4 = arith.constant 0 : index
    %4 = vector.load %arg3[%c0_3, %c0_4] : memref<1x64xf32, #tpu.memory_space<vmem>>, vector<1x64xf32>
    %5 = vector.broadcast %4 : vector<1x64xf32> to vector<8x64xf32>
    %6 = arith.addf %3, %5 : vector<8x64xf32>
    %cst_5 = arith.constant 0.000000e+00 : f32
    %7 = vector.broadcast %cst_5 : f32 to vector<8x64xf32>
    %8 = arith.maximumf %6, %7 : vector<8x64xf32>
    %9 = arith.truncf %8 : vector<8x64xf32> to vector<8x64xbf16>
    %c0_6 = arith.constant 0 : index
    %c0_7 = arith.constant 0 : index
    %10 = vector.load %arg4[%c0_6, %c0_7] : memref<64x32xbf16, #tpu.memory_space<vmem>>, vector<64x32xbf16>
    %cst_8 = arith.constant dense<0.000000e+00> : vector<8x32xf32>
    %11 = tpu.matmul %9, %10, %cst_8 {dimension_numbers = #tpu.dot_dimension_numbers<[1], [0], [0], [1], [0, 0, 1, 1], [], []>} : vector<8x64xbf16>, vector<64x32xbf16>, vector<8x32xf32> -> vector<8x32xf32>
    %c0_9 = arith.constant 0 : index
    %c0_10 = arith.constant 0 : index
    %12 = vector.load %arg5[%c0_9, %c0_10] : memref<1x32xf32, #tpu.memory_space<vmem>>, vector<1x32xf32>
    %13 = vector.broadcast %12 : vector<1x32xf32> to vector<8x32xf32>
    %14 = arith.addf %11, %13 : vector<8x32xf32>
    %15 = arith.addf %14, %0 : vector<8x32xf32>
    %cst_11 = arith.constant dense<0.000000e+00> : vector<8xf32>
    %16 = vector.multi_reduction <add>, %15, %cst_11 [1] : vector<8x32xf32> to vector<8xf32>
    %17 = vector.shape_cast %16 : vector<8xf32> to vector<8x1xf32>
    %cst_12 = arith.constant 3.200000e+01 : f32
    %18 = vector.broadcast %cst_12 : f32 to vector<8x1xf32>
    %19 = arith.divf %17, %18 : vector<8x1xf32>
    %20 = vector.broadcast %19 : vector<8x1xf32> to vector<8x32xf32>
    %21 = arith.subf %15, %20 : vector<8x32xf32>
    %22 = arith.mulf %21, %21 : vector<8x32xf32>
    %cst_13 = arith.constant dense<0.000000e+00> : vector<8xf32>
    %23 = vector.multi_reduction <add>, %22, %cst_13 [1] : vector<8x32xf32> to vector<8xf32>
    %24 = vector.shape_cast %23 : vector<8xf32> to vector<8x1xf32>
    %cst_14 = arith.constant 3.200000e+01 : f32
    %25 = vector.broadcast %cst_14 : f32 to vector<8x1xf32>
    %26 = arith.divf %24, %25 : vector<8x1xf32>
    %c0_15 = arith.constant 0 : index
    %c0_16 = arith.constant 0 : index
    %27 = vector.load %arg6[%c0_15, %c0_16] : memref<1x32xf32, #tpu.memory_space<vmem>>, vector<1x32xf32>
    %28 = vector.broadcast %27 : vector<1x32xf32> to vector<8x32xf32>
    %29 = arith.mulf %21, %28 : vector<8x32xf32>
    %cst_17 = arith.constant dense<0.000000e+00> : vector<8xf32>
    %30 = vector.multi_reduction <add>, %29, %cst_17 [1] : vector<8x32xf32> to vector<8xf32>
    %31 = vector.shape_cast %30 : vector<8xf32> to vector<8x1xf32>
    %cst_18 = arith.constant 9.99999974E-6 : f32
    %32 = vector.broadcast %cst_18 : f32 to vector<8x1xf32>
    %33 = arith.addf %26, %32 : vector<8x1xf32>
    %34 = math.rsqrt %33 : vector<8x1xf32>
    %35 = arith.mulf %31, %34 : vector<8x1xf32>
    %c0_19 = arith.constant 0 : index
    %36 = memref.load %arg7[%c0_19] : memref<1xf32, #tpu.memory_space<smem>>
    %37 = vector.broadcast %36 : f32 to vector<8x1xf32>
    %38 = arith.addf %35, %37 : vector<8x1xf32>
    %c0_20 = arith.constant 0 : index
    %c0_21 = arith.constant 0 : index
    %39 = vector.load %arg8[%c0_20, %c0_21] : memref<8x1xf32, #tpu.memory_space<vmem>>, vector<8x1xf32>
    tpu.vector_store %arg8[%c0_20, %c0_21], %38 {strides = array<i32>} : memref<8x1xf32, #tpu.memory_space<vmem>>, vector<8x1xf32>,
    return
  }
  func.func @transform_0(%arg0: i32) -> (i32, i32) {
    %c0_i32 = arith.constant 0 : i32
    %c0_i32_0 = arith.constant 0 : i32
    return %arg0, %c0_i32 : i32, i32
  }
  func.func @transform_1(%arg0: i32) -> (i32, i32) {
    %c0_i32 = arith.constant 0 : i32
    %c0_i32_0 = arith.constant 0 : i32
    %c0_i32_1 = arith.constant 0 : i32
    return %c0_i32, %c0_i32_0 : i32, i32
  }
  func.func @transform_2(%arg0: i32) -> (i32, i32) {
    %c0_i32 = arith.constant 0 : i32
    %c0_i32_0 = arith.constant 0 : i32
    %c0_i32_1 = arith.constant 0 : i32
    return %c0_i32, %c0_i32_0 : i32, i32
  }
  func.func @transform_3(%arg0: i32) -> (i32, i32) {
    %c0_i32 = arith.constant 0 : i32
    %c0_i32_0 = arith.constant 0 : i32
    %c0_i32_1 = arith.constant 0 : i32
    return %c0_i32, %c0_i32_0 : i32, i32
  }
  func.func @transform_4(%arg0: i32) -> (i32, i32) {
    %c0_i32 = arith.constant 0 : i32
    %c0_i32_0 = arith.constant 0 : i32
    %c0_i32_1 = arith.constant 0 : i32
    return %c0_i32, %c0_i32_0 : i32, i32
  }
  func.func @transform_5(%arg0: i32) -> (i32, i32) {
    %c0_i32 = arith.constant 0 : i32
    %c0_i32_0 = arith.constant 0 : i32
    %c0_i32_1 = arith.constant 0 : i32
    return %c0_i32, %c0_i32_0 : i32, i32
  }
  func.func @transform_6(%arg0: i32) -> i32 {
    %c0_i32 = arith.constant 0 : i32
    %c0_i32_0 = arith.constant 0 : i32
    return %c0_i32 : i32
  }
  func.func @transform_7(%arg0: i32) -> (i32, i32) {
    %c0_i32 = arith.constant 0 : i32
    %c0_i32_0 = arith.constant 0 : i32
    return %arg0, %c0_i32 : i32, i32
  }
}

</mosaic_0001>

<llo_original>
// kernel: tpu_custom_call.1
$region0: #{tpu_custom_call.1}
  #allocation0 [shape = 'u32[]', space=smem, size = 0x4, offset = 0x4, fixed_abs, tag = 'smem constant byte address 0x4 - core index']
  #allocation1 [shape = 'u32[144,128]{1,0:T(1,128)}', space=vmem, size = 0x12000, scoped, tag = 'internal scratch']
  #allocation2 [shape = 'f32[1]{0:T(128)S(6)}', space=smem, size = 0x200, scoped, tag = 'scoped memory for tpu_custom_call.1']
  %s0 = inlined_call_operand.vmem [shape: f32[8,32], index: 0, kind: input, shape index: {}]
  %s1 = inlined_call_operand.vmem [shape: bf16[32,64], index: 1, kind: input, shape index: {}]
  %s2 = inlined_call_operand.vmem [shape: f32[1,64], index: 2, kind: input, shape index: {}]
  %s3 = inlined_call_operand.vmem [shape: bf16[64,32], index: 3, kind: input, shape index: {}]
  %s4 = inlined_call_operand.vmem [shape: f32[1,32], index: 4, kind: input, shape index: {}]
  %s5 = inlined_call_operand.vmem [shape: f32[1,32], index: 5, kind: input, shape index: {}]
  %s6 = inlined_call_operand.<no memory space> [shape: f32[1], index: 6, kind: input, shape index: {}]
  %s7 = inlined_call_operand.vmem [shape: f32[8,1], index: 7, kind: output, shape index: {}]
  %s8 = sld [smem:[#allocation0]]
  $region38: #{tpu_custom_call.1} parent=0
    _
  %s10 = ssub.s32 1, %s8
  %s11 = scalar_select 0, %s10, %s8
  %12 = sst [smem:[#allocation2]] %s6
  // Predicated region
  $region2: #{tpu_custom_call.1} parent=0 // pred_check
    _
  $region3: #{tpu_custom_call.1} parent=0 // pred_check_branch
    %14 = sbr.rel (0) target = $region5
  $region4: #{tpu_custom_call.1} parent=0 // pred_region
    _
  $region5: #{tpu_custom_call.1} parent=0 // pred_fallthru
    _
  // Predicated region
  $region6: #{tpu_custom_call.1} parent=0 // pred_check
    _
  $region7: #{tpu_custom_call.1} parent=0 // pred_check_branch
    %16 = sbr.rel (0) target = $region9
  $region8: #{tpu_custom_call.1} parent=0 // pred_region
    _
  $region9: #{tpu_custom_call.1} parent=0 // pred_fallthru
    _
  // Predicated region
  $region10: #{tpu_custom_call.1} parent=0 // pred_check
    _
  $region11: #{tpu_custom_call.1} parent=0 // pred_check_branch
    %18 = sbr.rel (0) target = $region13
  $region12: #{tpu_custom_call.1} parent=0 // pred_region
    _
  $region13: #{tpu_custom_call.1} parent=0 // pred_fallthru
    _
  // Predicated region
  $region14: #{tpu_custom_call.1} parent=0 // pred_check
    _
  $region15: #{tpu_custom_call.1} parent=0 // pred_check_branch
    %20 = sbr.rel (0) target = $region17
  $region16: #{tpu_custom_call.1} parent=0 // pred_region
    _
  $region17: #{tpu_custom_call.1} parent=0 // pred_fallthru
    _
  // Predicated region
  $region18: #{tpu_custom_call.1} parent=0 // pred_check
    _
  $region19: #{tpu_custom_call.1} parent=0 // pred_check_branch
    %22 = sbr.rel (0) target = $region21
  $region20: #{tpu_custom_call.1} parent=0 // pred_region
    _
  $region21: #{tpu_custom_call.1} parent=0 // pred_fallthru
    _
  // Predicated region
  $region22: #{tpu_custom_call.1} parent=0 // pred_check
    _
  $region23: #{tpu_custom_call.1} parent=0 // pred_check_branch
    %24 = sbr.rel (0) target = $region25
  $region24: #{tpu_custom_call.1} parent=0 // pred_region
    _
  $region25: #{tpu_custom_call.1} parent=0 // pred_fallthru
    _
  // Predicated region
  $region26: #{tpu_custom_call.1} parent=0 // pred_check
    _
  $region27: #{tpu_custom_call.1} parent=0 // pred_check_branch
    %26 = sbr.rel (0) target = $region29
  $region28: #{tpu_custom_call.1} parent=0 // pred_region
    _
  $region29: #{tpu_custom_call.1} parent=0 // pred_fallthru
    _
  %v28 = vld [vmem:[%s0] sm:$0xff]
  %v29 = vpack.c.bf16 %v28, %v28
  %v30 = vld [vmem:[%s1] sm:$0xf]
  %v31 = vld [vmem:[%s1 + $0x4] sm:$0xf]
  %v32 = vld [vmem:[%s1 + $0x8] sm:$0xf]
  %v33 = vld [vmem:[%s1 + $0xc] sm:$0xf]
  %v34 = vld [vmem:[%s2] sm:$0x1]
  %v36 = vlaneseq
  %v37 = vshrl.u32 %v36, 7
  %v38 = vsub.s32 0, %v37
  %v39 = vrot.slane %v34, %v38
  %v45 = vunpack.c.l.b16 %v30
  %v46 = vunpack.c.l.b16 %v31
  %v47 = vunpack.c.l.b16 %v32
  %v48 = vunpack.c.l.b16 %v33
  %v49 = vpack.c.b16 %v46, %v45
  %v50 = vpack.c.b16 %v48, %v47
  %vm53 = vcmask 261120
  %v55 = vsel %vm53, %v29, 0
  %57 = vmatprep.subr.bf16.mxu0 0
  %58 = vmatpush1.bf16.msra.mxu0 %v49
  %59 = vmatprep.subr.bf16.mxu0 0
  %60 = vmatpush1.bf16.msra.mxu0 %v50
  %61 = vmatprep.subr.bf16.mxu0 0
  %62 = vmatpush1.bf16.msra.mxu0 0
  %63 = vmatprep.subr.bf16.mxu0 0
  %64 = vmatpush1.bf16.msra.mxu0 0
  %65 = vmatprep.subr.bf16.mxu0 0
  %66 = vmatpush1.bf16.msra.mxu0 0
  %67 = vmatprep.subr.bf16.mxu0 0
  %68 = vmatpush1.bf16.msra.mxu0 0
  %69 = vmatprep.subr.bf16.mxu0 0
  %70 = vmatpush1.bf16.msra.mxu0 0
  %71 = vmatprep.subr.bf16.mxu0 0
  %72 = vmatpush1.bf16.msra.mxu0 0
  %73 = vmatprep.subr.bf16.mxu0 0
  %74 = vmatpush1.bf16.msra.mxu0 0
  %75 = vmatprep.subr.bf16.mxu0 0
  %76 = vmatpush1.bf16.msra.mxu0 0
  %77 = vmatprep.subr.bf16.mxu0 0
  %78 = vmatpush1.bf16.msra.mxu0 0
  %79 = vmatprep.subr.bf16.mxu0 0
  %80 = vmatpush1.bf16.msra.mxu0 0
  %81 = vmatprep.subr.bf16.mxu0 0
  %82 = vmatpush1.bf16.msra.mxu0 0
  %83 = vmatprep.subr.bf16.mxu0 0
  %84 = vmatpush1.bf16.msra.mxu0 0
  %85 = vmatprep.subr.bf16.mxu0 0
  %86 = vmatpush1.bf16.msra.mxu0 0
  %87 = vmatprep.subr.bf16.mxu0 0
  %88 = vmatpush1.bf16.msra.mxu0 0
  %89 = vmatprep.mubr.bf16.mxu0 0
  %90 = vmatmul.mubr.bf16.gmra.mrb[0].mxu0 %v55
  %v91 = vpop.f32.mrb[0].mxu0
  %v92 = vadd.f32 %v39, %v91
  %v93 = vpop.f32.mrb[0].mxu0
  %v94 = vpop.f32.mrb[0].mxu0
  %v95 = vpop.f32.mrb[0].mxu0
  %96 = vdwg.mxu0
  %v97 = vmax.f32 %v92, 0.0
  %v98 = vpack.c.bf16 %v97, %v97
  %v99 = vld [vmem:[%s3] sm:$0xf]
  %v100 = vld [vmem:[%s3 + $0x4] sm:$0xf]
  %v101 = vld [vmem:[%s3 + $0x8] sm:$0xf]
  %v102 = vld [vmem:[%s3 + $0xc] sm:$0xf]
  %v103 = vld [vmem:[%s3 + $0x10] sm:$0xf]
  %v104 = vld [vmem:[%s3 + $0x14] sm:$0xf]
  %v105 = vld [vmem:[%s3 + $0x18] sm:$0xf]
  %v106 = vld [vmem:[%s3 + $0x1c] sm:$0xf]
  %v107 = vld [vmem:[%s4] sm:$0x1]
  %v109 = vlaneseq
  %v110 = vshrl.u32 %v109, 7
  %v111 = vsub.s32 0, %v110
  %v112 = vrot.slane %v107, %v111
  %v122 = vunpack.c.l.b16 %v99
  %v123 = vunpack.c.l.b16 %v100
  %v124 = vunpack.c.l.b16 %v101
  %v125 = vunpack.c.l.b16 %v102
  %v126 = vunpack.c.l.b16 %v103
  %v127 = vunpack.c.l.b16 %v104
  %v128 = vunpack.c.l.b16 %v105
  %v129 = vunpack.c.l.b16 %v106
  %v130 = vpack.c.b16 %v123, %v122
  %v131 = vpack.c.b16 %v125, %v124
  %v132 = vpack.c.b16 %v127, %v126
  %v133 = vpack.c.b16 %v129, %v128
  %vm138 = vcmask 523264
  %v140 = vsel %vm138, %v98, 0
  %142 = vmatprep.subr.bf16.mxu0 0
  %143 = vmatpush1.bf16.msra.mxu0 %v130
  %144 = vmatprep.subr.bf16.mxu0 0
  %145 = vmatpush1.bf16.msra.mxu0 %v131
  %146 = vmatprep.subr.bf16.mxu0 0
  %147 = vmatpush1.bf16.msra.mxu0 %v132
  %148 = vmatprep.subr.bf16.mxu0 0
  %149 = vmatpush1.bf16.msra.mxu0 %v133
  %150 = vmatprep.subr.bf16.mxu0 0
  %151 = vmatpush1.bf16.msra.mxu0 0
  %152 = vmatprep.subr.bf16.mxu0 0
  %153 = vmatpush1.bf16.msra.mxu0 0
  %154 = vmatprep.subr.bf16.mxu0 0
  %155 = vmatpush1.bf16.msra.mxu0 0
  %156 = vmatprep.subr.bf16.mxu0 0
  %157 = vmatpush1.bf16.msra.mxu0 0
  %158 = vmatprep.subr.bf16.mxu0 0
  %159 = vmatpush1.bf16.msra.mxu0 0
  %160 = vmatprep.subr.bf16.mxu0 0
  %161 = vmatpush1.bf16.msra.mxu0 0
  %162 = vmatprep.subr.bf16.mxu0 0
  %163 = vmatpush1.bf16.msra.mxu0 0
  %164 = vmatprep.subr.bf16.mxu0 0
  %165 = vmatpush1.bf16.msra.mxu0 0
  %166 = vmatprep.subr.bf16.mxu0 0
  %167 = vmatpush1.bf16.msra.mxu0 0
  %168 = vmatprep.subr.bf16.mxu0 0
  %169 = vmatpush1.bf16.msra.mxu0 0
  %170 = vmatprep.subr.bf16.mxu0 0
  %171 = vmatpush1.bf16.msra.mxu0 0
  %172 = vmatprep.subr.bf16.mxu0 0
  %173 = vmatpush1.bf16.msra.mxu0 0
  %174 = vmatprep.mubr.bf16.mxu0 0
  %175 = vmatmul.mubr.bf16.gmra.mrb[0].mxu0 %v140
  %v176 = vpop.f32.mrb[0].mxu0
  %v177 = vadd.f32 %v112, %v176
  %v178 = vpop.f32.mrb[0].mxu0
  %v179 = vpop.f32.mrb[0].mxu0
  %v180 = vpop.f32.mrb[0].mxu0
  %181 = vdwg.mxu0
  %v182 = vadd.f32 %v177, %v28
  %v183 = vsel %vm53, %v182, 0.0
  %184 = vadd.xlane.f32.xlu0 %v183
  %v185 = vpop.xlane.xlu0 %184
  %v186 = vrcp.pop 32.0
  %v187 = vmul.f32 %v185, %v186
  %v188 = vsub.f32 %v182, %v187
  %v189 = vmul.f32 %v188, %v188
  %v190 = vsel %vm53, %v189, 0.0
  %191 = vadd.xlane.f32.xlu0 %v190
  %v192 = vpop.xlane.xlu0 %191
  %v193 = vmul.f32 %v192, %v186
  %v194 = vld [vmem:[%s5] sm:$0x1]
  %v196 = vlaneseq
  %v197 = vshrl.u32 %v196, 7
  %v198 = vsub.s32 0, %v197
  %v199 = vrot.slane %v194, %v198
  %v201 = vmul.f32 %v188, %v199
  %v202 = vsel %vm53, %v201, 0.0
  %203 = vadd.xlane.f32.xlu0 %v202
  %v204 = vpop.xlane.xlu0 %203
  %v205 = vadd.f32 %v193, 1e-05
  %v206 = vrsqrt.pop %v205
  %v207 = vmul.f32 %v204, %v206
  %s208 = sld [smem:[#allocation2]]
  %v209 = vstv %s208
  %v210 = vadd.f32 %v207, %v209
  %vm211 = vcmask 7168
  %212 = vst.msk [vmem:[%s7] sm:$0xff] %vm211, %v210
  // Predicated region
  $region30: #{tpu_custom_call.1} parent=0 // pred_check
    _
  $region31: #{tpu_custom_call.1} parent=0 // pred_check_branch
    %214 = sbr.rel (0) target = $region33
  $region32: #{tpu_custom_call.1} parent=0 // pred_region
    _
  $region33: #{tpu_custom_call.1} parent=0 // pred_fallthru
    _
  // Predicated region
  $region34: #{tpu_custom_call.1} parent=0 // pred_check
    _
  $region35: #{tpu_custom_call.1} parent=0 // pred_check_branch
    %216 = sbr.rel (0) target = $region37
  $region36: #{tpu_custom_call.1} parent=0 // pred_region
    _
  $region37: #{tpu_custom_call.1} parent=0 // pred_fallthru
    _

</llo_original>
